<compile_context>
chip_gen: v5e
topology: v5e:2x2
jax: 0.10.0
libtpu: 0.0.40
codegen_flags: <defaults>
</compile_context>

<pallas_src>
import functools

import jax
import jax.numpy as jnp
from jax.experimental import pallas as pl
from jax.experimental.pallas import tpu as pltpu


# ---------------------------------------------------------------------------
# VMEM helpers
# ---------------------------------------------------------------------------
def _vmem_capacity_bytes():
    try:
        return int(pltpu.get_tpu_info().vmem_capacity_bytes)
    except Exception:
        return 64 << 20  # conservative (v7x-sized) fallback


def _clamp_vmem(need_bytes, cap_bytes):
    ceiling = max(cap_bytes - (8 << 20), 24 << 20)
    return int(min(max(need_bytes + (4 << 20), 32 << 20), ceiling))


# ---------------------------------------------------------------------------
# Fused kernel: pool + MLP + sigmoid + apply, one HBM read / one write of x
# ---------------------------------------------------------------------------
def _fused_kernel(x_ref, w1t_ref, b1_ref, w2t_ref, b2_ref, o_ref, *, inv_hw):
    x = x_ref[0]                                             # (C, HW) storage dtype
    xf = x.astype(jnp.float32)

    avg_v = jnp.sum(xf, axis=-1, keepdims=True) * jnp.float32(inv_hw)   # (C, 1)
    max_v = jnp.max(xf, axis=-1, keepdims=True)                         # (C, 1)
    v = jnp.concatenate([avg_v, max_v], axis=1)                         # (C, 2)

    h = jnp.dot(w1t_ref[...], v,
                preferred_element_type=jnp.float32) + b1_ref[...]       # (Cr, 2)
    h = jnp.maximum(h, 0.0)
    o = jnp.dot(w2t_ref[...], h,
                preferred_element_type=jnp.float32) + b2_ref[...]       # (C, 2)
    gate = jax.nn.sigmoid(o[:, 0:1] + o[:, 1:2])                        # (C, 1) f32

    # Multiply in the storage dtype (bf16 stays bf16 on v6e/v7x VALUs).
    o_ref[0] = (x * gate.astype(x.dtype)).astype(o_ref.dtype)


def _fused_path(x, w1, b1, w2, b2, B, C, Cr, HW, dtype, need_bytes, cap):
    w1t = jnp.asarray(w1, jnp.float32).T           # (Cr, C)
    w2t = jnp.asarray(w2, jnp.float32).T           # (C, Cr)
    b1c = jnp.asarray(b1, jnp.float32).reshape(Cr, 1)
    b2c = jnp.asarray(b2, jnp.float32).reshape(C, 1)

    kernel = functools.partial(_fused_kernel, inv_hw=1.0 / HW)
    return pl.pallas_call(
        kernel,
        out_shape=jax.ShapeDtypeStruct((B, C, HW), dtype),
        grid_spec=pltpu.PrefetchScalarGridSpec(
            num_scalar_prefetch=0,
            grid=(B,),
            in_specs=[
                pl.BlockSpec((1, C, HW), lambda b: (b, 0, 0)),
                pl.BlockSpec((Cr, C), lambda b: (0, 0)),
                pl.BlockSpec((Cr, 1), lambda b: (0, 0)),
                pl.BlockSpec((C, Cr), lambda b: (0, 0)),
                pl.BlockSpec((C, 1), lambda b: (0, 0)),
            ],
            out_specs=pl.BlockSpec((1, C, HW), lambda b: (b, 0, 0)),
        ),
        compiler_params=pltpu.CompilerParams(
            dimension_semantics=("parallel",),
            vmem_limit_bytes=_clamp_vmem(need_bytes, cap),
        ),
    )(x, w1t, b1c, w2t, b2c)


# ---------------------------------------------------------------------------
# Fallback phase 1: pooling only (sum & max per channel)
# ---------------------------------------------------------------------------
def _pool_kernel(x_ref, sum_ref, max_ref, *, valid_rem):
    k = pl.program_id(2)
    nk = pl.num_programs(2)

    @pl.when(k == 0)
    def _init():
        sum_ref[...] = jnp.zeros_like(sum_ref)
        max_ref[...] = jnp.full_like(max_ref, -jnp.inf)

    x = x_ref[...].astype(jnp.float32)             # (1, tc, thw)

    if valid_rem is None:
        sum_ref[...] += jnp.sum(x, axis=-1, keepdims=True)
        max_ref[...] = jnp.maximum(max_ref[...],
                                   jnp.max(x, axis=-1, keepdims=True))
    else:
        # Mask only the ragged last HW tile; full tiles take the cheap path.
        @pl.when(k < nk - 1)
        def _full():
            sum_ref[...] += jnp.sum(x, axis=-1, keepdims=True)
            max_ref[...] = jnp.maximum(max_ref[...],
                                       jnp.max(x, axis=-1, keepdims=True))

        @pl.when(k == nk - 1)
        def _ragged():
            lane = jax.lax.broadcasted_iota(jnp.int32, x.shape, 2)
            valid = lane < valid_rem
            xs = jnp.where(valid, x, 0.0)
            xm = jnp.where(valid, x, -jnp.inf)
            sum_ref[...] += jnp.sum(xs, axis=-1, keepdims=True)
            max_ref[...] = jnp.maximum(max_ref[...],
                                       jnp.max(xm, axis=-1, keepdims=True))


# ---------------------------------------------------------------------------
# Fallback phase 2: elementwise gate application
# ---------------------------------------------------------------------------
def _apply_kernel(x_ref, g_ref, o_ref):
    x = x_ref[...]                                 # (1, tc, thw) storage dtype
    g = g_ref[...].astype(x.dtype)                 # (1, tc, 1)
    o_ref[...] = (x * g).astype(o_ref.dtype)


def _pick_fallback_tiles(C, HW, itemsize, block_budget):
    # Channel tile: full C when small; otherwise a sublane-aligned slice
    # (ragged final C tile handled by Pallas-masked stores).
    tc = C if C <= 512 else 512
    # Spatial tile: full HW if it fits the per-block budget, else the largest
    # 128-lane multiple that does (ragged final tile masked in-kernel).
    lanes = max(block_budget // max(tc * itemsize, 1), 128)
    if lanes >= HW:
        thw = HW
    else:
        thw = max((lanes // 128) * 128, 128)
    return tc, thw


def _two_phase_path(x, w1, b1, w2, b2, B, C, Cr, HW, dtype, itemsize, cap,
                    block_budget):
    if block_budget is None:
        # ~8 MiB blocks on v7x (64 MiB VMEM), ~16 MiB on v5e/v6e (128 MiB).
        block_budget = (16 << 20) if cap > (64 << 20) else (8 << 20)

    tc, thw = _pick_fallback_tiles(C, HW, itemsize, block_budget)
    n_c = pl.cdiv(C, tc)
    n_hw = pl.cdiv(HW, thw)
    valid_rem = None if HW % thw == 0 else HW - (n_hw - 1) * thw
    blk_bytes = tc * thw * itemsize

    # Phase 1: pooled sums & maxes, (B, C, 1) each.
    pool_fn = functools.partial(_pool_kernel, valid_rem=valid_rem)
    sums, maxs = pl.pallas_call(
        pool_fn,
        out_shape=(jax.ShapeDtypeStruct((B, C, 1), jnp.float32),
                   jax.ShapeDtypeStruct((B, C, 1), jnp.float32)),
        grid_spec=pltpu.PrefetchScalarGridSpec(
            num_scalar_prefetch=0,
            grid=(B, n_c, n_hw),
            in_specs=[pl.BlockSpec((1, tc, thw), lambda b, c, k: (b, c, k))],
            out_specs=[pl.BlockSpec((1, tc, 1), lambda b, c, k: (b, c, 0)),
                       pl.BlockSpec((1, tc, 1), lambda b, c, k: (b, c, 0))],
        ),
        compiler_params=pltpu.CompilerParams(
            dimension_semantics=("parallel", "parallel", "arbitrary"),
            vmem_limit_bytes=_clamp_vmem(2 * blk_bytes + 2 * tc * thw * 4, cap),
        ),
    )(x)

    # Tiny MLP + sigmoid on pooled stats in plain JAX (negligible cost; keeps
    # weights and the serial MLP off the streaming kernels' critical path).
    w1f = jnp.asarray(w1, jnp.float32)
    w2f = jnp.asarray(w2, jnp.float32)
    b1f = jnp.asarray(b1, jnp.float32)
    b2f = jnp.asarray(b2, jnp.float32)
    avg_bc = sums[:, :, 0] * jnp.float32(1.0 / HW)            # (B, C)
    max_bc = maxs[:, :, 0]                                    # (B, C)

    def mlp(v):
        return jnp.maximum(v @ w1f + b1f, 0.0) @ w2f + b2f

    gate = jax.nn.sigmoid(mlp(avg_bc) + mlp(max_bc))[:, :, None]   # (B, C, 1)

    # Phase 2: out = x * gate, fully parallel.
    out = pl.pallas_call(
        _apply_kernel,
        out_shape=jax.ShapeDtypeStruct((B, C, HW), dtype),
        grid_spec=pltpu.PrefetchScalarGridSpec(
            num_scalar_prefetch=0,
            grid=(B, n_c, n_hw),
            in_specs=[pl.BlockSpec((1, tc, thw), lambda b, c, k: (b, c, k)),
                      pl.BlockSpec((1, tc, 1), lambda b, c, k: (b, c, 0))],
            out_specs=pl.BlockSpec((1, tc, thw), lambda b, c, k: (b, c, k)),
        ),
        compiler_params=pltpu.CompilerParams(
            dimension_semantics=("parallel", "parallel", "parallel"),
            vmem_limit_bytes=_clamp_vmem(4 * blk_bytes, cap),
        ),
    )(x, gate)
    return out


# ---------------------------------------------------------------------------
# Wrapper
# ---------------------------------------------------------------------------
def channel_attention(x_nchw, w1, b1, w2, b2, *,
                      force_two_phase=False, block_budget=None):
    """x_nchw: (B, C, H, W). Weights in math convention:
    w1: (C, C//r), b1: (C//r,), w2: (C//r, C), b2: (C,)."""
    B, C, H, W = x_nchw.shape
    Cr = w1.shape[1]
    HW = H * W
    dtype = x_nchw.dtype
    itemsize = jnp.dtype(dtype).itemsize

    x = x_nchw.reshape(B, C, HW)      # no padding, no extra HBM copies

    cap = _vmem_capacity_bytes()
    vmem_budget = max(cap - (16 << 20), 32 << 20)

    slab = C * HW * itemsize
    f32_work = 0 if dtype == jnp.float32 else C * HW * 4
    w_bytes = (Cr * C + C * Cr + Cr + C) * 4
    fused_need = 4 * slab + f32_work + 2 * w_bytes + (2 << 20)

    if (not force_two_phase) and fused_need <= vmem_budget:
        out = _fused_path(x, w1, b1, w2, b2, B, C, Cr, HW, dtype,
                          fused_need, cap)
    else:
        out = _two_phase_path(x, w1, b1, w2, b2, B, C, Cr, HW, dtype,
                              itemsize, cap, block_budget)
    return out.reshape(B, C, H, W)


# ---------------------------------------------------------------------------
# Pure-JAX reference matching the PyTorch forward
# ---------------------------------------------------------------------------
def channel_attention_ref(x_nchw, w1, b1, w2, b2):
    avg_v = jnp.mean(x_nchw, axis=(2, 3))            # (B, C)
    max_v = jnp.max(x_nchw, axis=(2, 3))             # (B, C)

    def mlp(v):
        return jnp.maximum(v @ w1 + b1, 0.0) @ w2 + b2

    out = mlp(avg_v) + mlp(max_v)                    # (B, C)
    scale = jax.nn.sigmoid(out)[:, :, None, None]    # (B, C, 1, 1)
    return x_nchw * scale


if __name__ == "__main__":
    def run_case(key, B, C, H, W, reduction_ratio=16, **kw):
        Cr = max(C // reduction_ratio, 1)
        kx, k1, k2, k3, k4 = jax.random.split(key, 5)
        x = jax.random.normal(kx, (B, C, H, W), dtype=jnp.float32)
        lim1 = 1.0 / jnp.sqrt(jnp.float32(C))
        lim2 = 1.0 / jnp.sqrt(jnp.float32(Cr))
        w1 = jax.random.uniform(k1, (C, Cr), jnp.float32, -lim1, lim1)
        b1 = jax.random.uniform(k2, (Cr,), jnp.float32, -lim1, lim1)
        w2 = jax.random.uniform(k3, (Cr, C), jnp.float32, -lim2, lim2)
        b2 = jax.random.uniform(k4, (C,), jnp.float32, -lim2, lim2)

        y = jax.block_until_ready(channel_attention(x, w1, b1, w2, b2, **kw))
        y_ref = channel_attention_ref(x, w1, b1, w2, b2)
        assert y.shape == (B, C, H, W)
        assert jnp.allclose(y, y_ref, atol=1e-5, rtol=1e-5), "mismatch vs reference"

    key = jax.random.PRNGKey(0)
    k0, k1, k2 = jax.random.split(key, 3)
    # Fused path, 128-aligned spatial.
    run_case(k0, B=2, C=64, H=16, W=16)
    # Fused path, non-aligned spatial (HW = 49) — handled with no padding.
    run_case(k1, B=2, C=32, H=7, W=7)
    # Two-phase fallback path with a ragged last HW tile (HW = 221, thw = 128).
    run_case(k2, B=2, C=32, H=13, W=17, force_two_phase=True,
             block_budget=32 * 4 * 128)
    print("KERNEL_OK")
</pallas_src>

<mosaic_0001>
module attributes {stable_mosaic.version = 11 : i64} {
  func.func @_fused_kernel(%arg0: i32, %arg1: memref<1x64x256xf32, #tpu.memory_space<vmem>>, %arg2: memref<4x64xf32, #tpu.memory_space<vmem>>, %arg3: memref<4x1xf32, #tpu.memory_space<vmem>>, %arg4: memref<64x4xf32, #tpu.memory_space<vmem>>, %arg5: memref<64x1xf32, #tpu.memory_space<vmem>>, %arg6: memref<1x64x256xf32, #tpu.memory_space<vmem>>) attributes {dimension_semantics = [#tpu.dimension_semantics<parallel>], iteration_bounds = array<i64: 2>, scalar_prefetch = 0 : i64, scratch_operands = 0 : i64, tpu.core_type = #tpu.core_type<tc>, window_params = [{transform_indices = @transform_0, window_bounds = array<i64: 1, 64, 256>}, {pipeline_mode = #tpu.pipeline_mode<synchronous>, transform_indices = @transform_1, window_bounds = array<i64: 4, 64>}, {pipeline_mode = #tpu.pipeline_mode<synchronous>, transform_indices = @transform_2, window_bounds = array<i64: 4, 1>}, {pipeline_mode = #tpu.pipeline_mode<synchronous>, transform_indices = @transform_3, window_bounds = array<i64: 64, 4>}, {pipeline_mode = #tpu.pipeline_mode<synchronous>, transform_indices = @transform_4, window_bounds = array<i64: 64, 1>}, {transform_indices = @transform_5, window_bounds = array<i64: 1, 64, 256>}]} {
    %c0 = arith.constant 0 : index
    %c0_0 = arith.constant 0 : index
    %c0_1 = arith.constant 0 : index
    %0 = vector.load %arg1[%c0, %c0_0, %c0_1] : memref<1x64x256xf32, #tpu.memory_space<vmem>>, vector<1x64x256xf32>
    %1 = vector.shape_cast %0 : vector<1x64x256xf32> to vector<64x256xf32>
    %cst = arith.constant dense<0.000000e+00> : vector<64xf32>
    %2 = vector.multi_reduction <add>, %1, %cst [1] : vector<64x256xf32> to vector<64xf32>
    %3 = vector.shape_cast %2 : vector<64xf32> to vector<64x1xf32>
    %cst_2 = arith.constant 3.906250e-03 : f32
    %4 = vector.broadcast %cst_2 : f32 to vector<64x1xf32>
    %5 = arith.mulf %3, %4 : vector<64x1xf32>
    %cst_3 = arith.constant dense<0xFF800000> : vector<64xf32>
    %6 = vector.multi_reduction <maximumf>, %1, %cst_3 [1] : vector<64x256xf32> to vector<64xf32>
    %7 = vector.shape_cast %6 : vector<64xf32> to vector<64x1xf32>
    %8 = tpu.concatenate %5, %7 in 1 : vector<64x1xf32>, vector<64x1xf32> -> vector<64x2xf32>
    %c0_4 = arith.constant 0 : index
    %c0_5 = arith.constant 0 : index
    %9 = vector.load %arg2[%c0_4, %c0_5] : memref<4x64xf32, #tpu.memory_space<vmem>>, vector<4x64xf32>
    %cst_6 = arith.constant dense<0.000000e+00> : vector<4x2xf32>
    %10 = tpu.matmul %9, %8, %cst_6 {dimension_numbers = #tpu.dot_dimension_numbers<[1], [0], [0], [1], [0, 0, 1, 1], [], []>} : vector<4x64xf32>, vector<64x2xf32>, vector<4x2xf32> -> vector<4x2xf32>
    %c0_7 = arith.constant 0 : index
    %c0_8 = arith.constant 0 : index
    %11 = vector.load %arg3[%c0_7, %c0_8] : memref<4x1xf32, #tpu.memory_space<vmem>>, vector<4x1xf32>
    %12 = vector.broadcast %11 : vector<4x1xf32> to vector<4x2xf32>
    %13 = arith.addf %10, %12 : vector<4x2xf32>
    %cst_9 = arith.constant 0.000000e+00 : f32
    %14 = vector.broadcast %cst_9 : f32 to vector<4x2xf32>
    %15 = arith.maximumf %13, %14 : vector<4x2xf32>
    %c0_10 = arith.constant 0 : index
    %c0_11 = arith.constant 0 : index
    %16 = vector.load %arg4[%c0_10, %c0_11] : memref<64x4xf32, #tpu.memory_space<vmem>>, vector<64x4xf32>
    %cst_12 = arith.constant dense<0.000000e+00> : vector<64x2xf32>
    %17 = tpu.matmul %16, %15, %cst_12 {dimension_numbers = #tpu.dot_dimension_numbers<[1], [0], [0], [1], [0, 0, 1, 1], [], []>} : vector<64x4xf32>, vector<4x2xf32>, vector<64x2xf32> -> vector<64x2xf32>
    %c0_13 = arith.constant 0 : index
    %c0_14 = arith.constant 0 : index
    %18 = vector.load %arg5[%c0_13, %c0_14] : memref<64x1xf32, #tpu.memory_space<vmem>>, vector<64x1xf32>
    %19 = vector.broadcast %18 : vector<64x1xf32> to vector<64x2xf32>
    %20 = arith.addf %17, %19 : vector<64x2xf32>
    %21 = vector.extract_strided_slice %20 {offsets = [0, 0], sizes = [64, 1], strides = [1, 1]} : vector<64x2xf32> to vector<64x1xf32>
    %22 = vector.extract_strided_slice %20 {offsets = [0, 1], sizes = [64, 1], strides = [1, 1]} : vector<64x2xf32> to vector<64x1xf32>
    %23 = arith.addf %21, %22 : vector<64x1xf32>
    %24 = arith.negf %23 : vector<64x1xf32>
    %25 = math.exp %24 : vector<64x1xf32>
    %cst_15 = arith.constant 1.000000e+00 : f32
    %26 = vector.broadcast %cst_15 : f32 to vector<64x1xf32>
    %27 = arith.addf %26, %25 : vector<64x1xf32>
    %28 = arith.divf %26, %27 : vector<64x1xf32>
    %29 = vector.broadcast %28 : vector<64x1xf32> to vector<64x256xf32>
    %30 = arith.mulf %1, %29 : vector<64x256xf32>
    %c0_16 = arith.constant 0 : index
    %c0_17 = arith.constant 0 : index
    %c0_18 = arith.constant 0 : index
    %31 = vector.load %arg6[%c0_16, %c0_17, %c0_18] : memref<1x64x256xf32, #tpu.memory_space<vmem>>, vector<1x64x256xf32>
    %32 = vector.shape_cast %31 : vector<1x64x256xf32> to vector<64x256xf32>
    %33 = vector.shape_cast %30 : vector<64x256xf32> to vector<1x64x256xf32>
    tpu.vector_store %arg6[%c0_16, %c0_17, %c0_18], %33 {strides = array<i32>} : memref<1x64x256xf32, #tpu.memory_space<vmem>>, vector<1x64x256xf32>,
    return
  }
  func.func @transform_0(%arg0: i32) -> (i32, i32, i32) {
    %c0_i32 = arith.constant 0 : i32
    %c0_i32_0 = arith.constant 0 : i32
    %c0_i32_1 = arith.constant 0 : i32
    return %arg0, %c0_i32, %c0_i32_0 : i32, i32, i32
  }
  func.func @transform_1(%arg0: i32) -> (i32, i32) {
    %c0_i32 = arith.constant 0 : i32
    %c0_i32_0 = arith.constant 0 : i32
    %c0_i32_1 = arith.constant 0 : i32
    return %c0_i32, %c0_i32_0 : i32, i32
  }
  func.func @transform_2(%arg0: i32) -> (i32, i32) {
    %c0_i32 = arith.constant 0 : i32
    %c0_i32_0 = arith.constant 0 : i32
    %c0_i32_1 = arith.constant 0 : i32
    return %c0_i32, %c0_i32_0 : i32, i32
  }
  func.func @transform_3(%arg0: i32) -> (i32, i32) {
    %c0_i32 = arith.constant 0 : i32
    %c0_i32_0 = arith.constant 0 : i32
    %c0_i32_1 = arith.constant 0 : i32
    return %c0_i32, %c0_i32_0 : i32, i32
  }
  func.func @transform_4(%arg0: i32) -> (i32, i32) {
    %c0_i32 = arith.constant 0 : i32
    %c0_i32_0 = arith.constant 0 : i32
    %c0_i32_1 = arith.constant 0 : i32
    return %c0_i32, %c0_i32_0 : i32, i32
  }
  func.func @transform_5(%arg0: i32) -> (i32, i32, i32) {
    %c0_i32 = arith.constant 0 : i32
    %c0_i32_0 = arith.constant 0 : i32
    %c0_i32_1 = arith.constant 0 : i32
    return %arg0, %c0_i32, %c0_i32_0 : i32, i32, i32
  }
}

</mosaic_0001>

<llo_original>
// kernel: tpu_custom_call.1
$region0: #{tpu_custom_call.1}
  #allocation0 [shape = 'u32[]', space=smem, size = 0x4, offset = 0x4, fixed_abs, tag = 'smem constant byte address 0x4 - core index']
  #allocation1 [shape = 'u32[72,128]{1,0:T(1,128)}', space=vmem, size = 0x9000, scoped, tag = 'internal scratch']
  %s0 = inlined_call_operand.hbm [shape: f32[2,64,256], index: 0, kind: input, shape index: {}]
  %s1 = inlined_call_operand.vmem [shape: f32[4,64], index: 1, kind: input, shape index: {}]
  %s2 = inlined_call_operand.vmem [shape: f32[4,1], index: 2, kind: input, shape index: {}]
  %s3 = inlined_call_operand.vmem [shape: f32[64,4], index: 3, kind: input, shape index: {}]
  %s4 = inlined_call_operand.vmem [shape: f32[64,1], index: 4, kind: input, shape index: {}]
  %s5 = inlined_call_operand.hbm [shape: f32[2,64,256], index: 5, kind: output, shape index: {}]
  %s6 = sld [smem:[#allocation0]]
  $region57: #{tpu_custom_call.1} parent=0
    _
  %s8 = ssub.s32 1, %s6
  %s9 = scalar_select 0, %s8, %s6
  $region1: #{tpu_custom_call.1} parent=0
    #allocation2 [shape = 'u8[131072]{0}', space=vmem, size = 0x20000, scoped, tag = 'input window, operand 0']
    #allocation3 [shape = 's32[2]{0}', space=sflag, size = 0x8, scoped, tag = 'scoped memory for tpu_custom_call.1']
    #allocation4 [shape = 's32[2]{0}', space=sflag, size = 0x8, scoped, tag = 'scoped memory for tpu_custom_call.1']
    #allocation5 [shape = 'u8[131072]{0}', space=vmem, size = 0x20000, scoped, tag = 'output window, operand 0']
    %10 = vsyncpa [#allocation3], 0
    %s11 = scalar_lea.sflag [#allocation3], 1
    %12 = vsyncpa %s11, 0
    %13 = vsyncpa [#allocation4], 0
    %s14 = scalar_lea.sflag [#allocation4], 1
    %15 = vsyncpa %s14, 0
    loop: start=0, step=1, limit=4
    $region2: #{tpu_custom_call.1} parent=1 // loop_pre_header
      _
    $region3: #{tpu_custom_call.1} parent=1 // loop_header
      %s17 = sphi 0, %s21
      %p18 = scmp.ge.s32.totalorder %s17, 4
      %s27 = sphi 0, %s29
      %s30 = sphi 0, %s27
      %s31 = sphi 0, %s30
      %s47 = sphi 0, %s31
      %s51 = sphi 0, %s51
      %s53 = sphi 0, %s51
      %s54 = sphi 0, %s53
      %s68 = sphi 0, %s54
      %s72 = sphi 0, %s72
      %s74 = sphi 0, %s72
      %s75 = sphi 0, %s74
      %s89 = sphi 0, %s75
      %s93 = sphi 0, %s93
      %s95 = sphi 0, %s93
      %s96 = sphi 0, %s95
      %s110 = sphi 0, %s96
      %s114 = sphi 0, %s114
      %s116 = sphi 0, %s114
      %s117 = sphi 0, %s116
      %s131 = sphi 0, %s117
      %s137 = sphi 0, %s139
      %s140 = sphi 0, %s137
      %s141 = sphi 0, %s140
      %s157 = sphi 0, %s141
    $region4: #{tpu_custom_call.1} parent=1 // loop_header_branch
      %20 = sbr.rel (%p18) target = $region8
    $region5: #{tpu_custom_call.1} parent=1 // loop_body
      %s22 = ssub.s32 %s17, 1
      %s23 = ssub.s32 %s17, 2
      %s24 = sadd.s32 %s17, 1
      %s25 = ssub.s32 %s17, %s24
      %p26 = scmp.eq.s32.totalorder %s25, 0
      %s28 = sadd.s32 %s27, 1
      %s29 = scalar_select %p26, %s27, %s28
      %p32 = pneg %p26
      %p33 = scmp.eq.s32.totalorder %s17, 1
      %p34 = por %p32, %p33
      %p35 = scmp.ne.s32.totalorder %s27, %s30
      %p36 = scmp.eq.s32.totalorder %s17, 0
      %p37 = por %p35, %p36
      %p38 = scmp.ne.s32.totalorder %s27, %s30
      %p39 = scmp.eq.s32.totalorder %s22, 1
      %p40 = por %p38, %p39
      %p41 = scmp.ne.s32.totalorder %s30, %s31
      %p42 = scmp.eq.s32.totalorder %s22, 0
      %p43 = por %p41, %p42
      %p44 = scmp.ne.s32.totalorder %s30, %s31
      %p45 = scmp.eq.s32.totalorder %s23, 1
      %p46 = por %p44, %p45
      %p48 = scmp.ne.s32.totalorder %s31, %s47
      %p49 = scmp.eq.s32.totalorder %s23, 0
      %p50 = por %p48, %p49
      %s52 = sadd.s32 %s51, 1
      %p55 = scmp.eq.s32.totalorder %s17, 1
      %p56 = scmp.ne.s32.totalorder %s51, %s53
      %p57 = scmp.eq.s32.totalorder %s17, 0
      %p58 = por %p56, %p57
      %p59 = scmp.ne.s32.totalorder %s51, %s53
      %p60 = scmp.eq.s32.totalorder %s22, 1
      %p61 = por %p59, %p60
      %p62 = scmp.ne.s32.totalorder %s53, %s54
      %p63 = scmp.eq.s32.totalorder %s22, 0
      %p64 = por %p62, %p63
      %p65 = scmp.ne.s32.totalorder %s53, %s54
      %p66 = scmp.eq.s32.totalorder %s23, 1
      %p67 = por %p65, %p66
      %p69 = scmp.ne.s32.totalorder %s54, %s68
      %p70 = scmp.eq.s32.totalorder %s23, 0
      %p71 = por %p69, %p70
      %s73 = sadd.s32 %s72, 1
      %p76 = scmp.eq.s32.totalorder %s17, 1
      %p77 = scmp.ne.s32.totalorder %s72, %s74
      %p78 = scmp.eq.s32.totalorder %s17, 0
      %p79 = por %p77, %p78
      %p80 = scmp.ne.s32.totalorder %s72, %s74
      %p81 = scmp.eq.s32.totalorder %s22, 1
      %p82 = por %p80, %p81
      %p83 = scmp.ne.s32.totalorder %s74, %s75
      %p84 = scmp.eq.s32.totalorder %s22, 0
      %p85 = por %p83, %p84
      %p86 = scmp.ne.s32.totalorder %s74, %s75
      %p87 = scmp.eq.s32.totalorder %s23, 1
      %p88 = por %p86, %p87
      %p90 = scmp.ne.s32.totalorder %s75, %s89
      %p91 = scmp.eq.s32.totalorder %s23, 0
      %p92 = por %p90, %p91
      %s94 = sadd.s32 %s93, 1
      %p97 = scmp.eq.s32.totalorder %s17, 1
      %p98 = scmp.ne.s32.totalorder %s93, %s95
      %p99 = scmp.eq.s32.totalorder %s17, 0
      %p100 = por %p98, %p99
      %p101 = scmp.ne.s32.totalorder %s93, %s95
      %p102 = scmp.eq.s32.totalorder %s22, 1
      %p103 = por %p101, %p102
      %p104 = scmp.ne.s32.totalorder %s95, %s96
      %p105 = scmp.eq.s32.totalorder %s22, 0
      %p106 = por %p104, %p105
      %p107 = scmp.ne.s32.totalorder %s95, %s96
      %p108 = scmp.eq.s32.totalorder %s23, 1
      %p109 = por %p107, %p108
      %p111 = scmp.ne.s32.totalorder %s96, %s110
      %p112 = scmp.eq.s32.totalorder %s23, 0
      %p113 = por %p111, %p112
      %s115 = sadd.s32 %s114, 1
      %p118 = scmp.eq.s32.totalorder %s17, 1
      %p119 = scmp.ne.s32.totalorder %s114, %s116
      %p120 = scmp.eq.s32.totalorder %s17, 0
      %p121 = por %p119, %p120
      %p122 = scmp.ne.s32.totalorder %s114, %s116
      %p123 = scmp.eq.s32.totalorder %s22, 1
      %p124 = por %p122, %p123
      %p125 = scmp.ne.s32.totalorder %s116, %s117
      %p126 = scmp.eq.s32.totalorder %s22, 0
      %p127 = por %p125, %p126
      %p128 = scmp.ne.s32.totalorder %s116, %s117
      %p129 = scmp.eq.s32.totalorder %s23, 1
      %p130 = por %p128, %p129
      %p132 = scmp.ne.s32.totalorder %s117, %s131
      %p133 = scmp.eq.s32.totalorder %s23, 0
      %p134 = por %p132, %p133
      %s135 = ssub.s32 %s17, %s24
      %p136 = scmp.eq.s32.totalorder %s135, 0
      %s138 = sadd.s32 %s137, 1
      %s139 = scalar_select %p136, %s137, %s138
      %p142 = pneg %p136
      %p143 = scmp.eq.s32.totalorder %s17, 1
      %p144 = por %p142, %p143
      %p145 = scmp.ne.s32.totalorder %s137, %s140
      %p146 = scmp.eq.s32.totalorder %s17, 0
      %p147 = por %p145, %p146
      %p148 = scmp.ne.s32.totalorder %s137, %s140
      %p149 = scmp.eq.s32.totalorder %s22, 1
      %p150 = por %p148, %p149
      %p151 = scmp.ne.s32.totalorder %s140, %s141
      %p152 = scmp.eq.s32.totalorder %s22, 0
      %p153 = por %p151, %p152
      %p154 = scmp.ne.s32.totalorder %s140, %s141
      %p155 = scmp.eq.s32.totalorder %s23, 1
      %p156 = por %p154, %p155
      %p158 = scmp.ne.s32.totalorder %s141, %s157
      %p159 = scmp.eq.s32.totalorder %s23, 0
      %p160 = por %p158, %p159
      %p161 = scmp.le.s32.totalorder 1, %s17
      %p162 = scmp.lt.s32.totalorder %s17, 3
      %p163 = pnand %p161, %p162
      %p164 = pneg %p163
      // Predicated region
      $region9: #{tpu_custom_call.1} parent=5 // pred_check
        _
      $region10: #{tpu_custom_call.1} parent=5 // pred_check_branch
        %166 = sbr.rel (%p163) target = $region12
      $region11: #{tpu_custom_call.1} parent=5 // pred_region
        %s167 = ssub.s32 %s17, 1
        // Predicated region
        $region13: #{tpu_custom_call.1} parent=11 // pred_check
          %p168 = pneg %p64
        $region14: #{tpu_custom_call.1} parent=11 // pred_check_branch
          %170 = sbr.rel (%p168) target = $region16
        $region15: #{tpu_custom_call.1} parent=11 // pred_region
          _
        $region16: #{tpu_custom_call.1} parent=11 // pred_fallthru
          _
        // Predicated region
        $region17: #{tpu_custom_call.1} parent=11 // pred_check
          %p171 = pneg %p85
        $region18: #{tpu_custom_call.1} parent=11 // pred_check_branch
          %173 = sbr.rel (%p171) target = $region20
        $region19: #{tpu_custom_call.1} parent=11 // pred_region
          _
        $region20: #{tpu_custom_call.1} parent=11 // pred_fallthru
          _
        // Predicated region
        $region21: #{tpu_custom_call.1} parent=11 // pred_check
          %p174 = pneg %p106
        $region22: #{tpu_custom_call.1} parent=11 // pred_check_branch
          %176 = sbr.rel (%p174) target = $region24
        $region23: #{tpu_custom_call.1} parent=11 // pred_region
          _
        $region24: #{tpu_custom_call.1} parent=11 // pred_fallthru
          _
        // Predicated region
        $region25: #{tpu_custom_call.1} parent=11 // pred_check
          %p177 = pneg %p127
        $region26: #{tpu_custom_call.1} parent=11 // pred_check_branch
          %179 = sbr.rel (%p177) target = $region28
        $region27: #{tpu_custom_call.1} parent=11 // pred_region
          _
        $region28: #{tpu_custom_call.1} parent=11 // pred_fallthru
          _
      $region12: #{tpu_custom_call.1} parent=5 // pred_fallthru
        _
      %p180 = scmp.lt.s32.totalorder %s17, 2
      // Predicated region
      $region29: #{tpu_custom_call.1} parent=5 // pred_check
        %p181 = pneg %p180
      $region30: #{tpu_custom_call.1} parent=5 // pred_check_branch
        %183 = sbr.rel (%p181) target = $region32
      $region31: #{tpu_custom_call.1} parent=5 // pred_region
        // Predicated region
        $region33: #{tpu_custom_call.1} parent=31 // pred_check
          %p184 = pneg %p37
        $region34: #{tpu_custom_call.1} parent=31 // pred_check_branch
          %186 = sbr.rel (%p184) target = $region36
        $region35: #{tpu_custom_call.1} parent=31 // pred_region
          %s187 = sand.u32 %s27, 1
          %s188 = scalar_lea.sflag [#allocation3], %s187
          %s189 = sand.u32 %s27, 1
          %s190 = smul.addr %s189, 128
          %s191 = scalar_lea.vmem [#allocation2], %s190
          %193 = vsyncadd %s188, 0
          %s194 = smul.addr %s17, 16
          %s195 = smul.addr %s194, 8
          %s196 = scalar_lea.hbm %s0, %s195
          %s197 = sshll.u32 %s196, 4
          %s198 = int_to_ptr.hbm [resolvable:$true] %s197
          %s199 = sshll.u32 %s191, 4
          %s200 = int_to_ptr.vmem [resolvable:$true] %s199
          %205 = dma.hbm_to_vmem [thread:$0]  %s198, 2048, %s200, %s188, 256, 256, 16
        $region36: #{tpu_custom_call.1} parent=31 // pred_fallthru
          _
      $region32: #{tpu_custom_call.1} parent=5 // pred_fallthru
        _
      %p206 = scmp.le.s32.totalorder 1, %s17
      %p207 = scmp.lt.s32.totalorder %s17, 3
      %p208 = pnand %p206, %p207
      %p209 = pneg %p208
      // Predicated region
      $region37: #{tpu_custom_call.1} parent=5 // pred_check
        _
      $region38: #{tpu_custom_call.1} parent=5 // pred_check_branch
        %211 = sbr.rel (%p208) target = $region40
      $region39: #{tpu_custom_call.1} parent=5 // pred_region
        %s212 = ssub.s32 %s17, 1
        %s213 = sand.u32 %s30, 1
        %s214 = scalar_lea.sflag [#allocation3], %s213
        %s215 = sand.u32 %s30, 1
        %s216 = smul.addr %s215, 128
        %s217 = scalar_lea.vmem [#allocation2], %s216
        // Predicated region
        $region41: #{tpu_custom_call.1} parent=39 // pred_check
          %p218 = pneg %p43
        $region42: #{tpu_custom_call.1} parent=39 // pred_check_branch
          %220 = sbr.rel (%p218) target = $region44
        $region43: #{tpu_custom_call.1} parent=39 // pred_region
          %222 = dma.done %s214, 2048
        $region44: #{tpu_custom_call.1} parent=39 // pred_fallthru
          _
        %s223 = sand.u32 %s30, 1
        %s224 = scalar_lea.sflag [#allocation3], %s223
        %s225 = sand.u32 %s30, 1
        %s226 = smul.addr %s225, 128
        %s227 = scalar_lea.vmem [#allocation2], %s226
        %p228 = pneg %p43
        %p229 = pneg %p40
        %p230 = pneg %p64
        %p231 = pneg %p61
        %p232 = pneg %p85
        %p233 = pneg %p82
        %p234 = pneg %p106
        %p235 = pneg %p103
        %p236 = pneg %p127
        %p237 = pneg %p124
        %p238 = pneg %p153
        %p239 = pneg %p150
        %s240 = sand.u32 %s140, 1
        %s241 = scalar_lea.sflag [#allocation4], %s240
        %s242 = sand.u32 %s140, 1
        %s243 = smul.addr %s242, 128
        %s244 = scalar_lea.vmem [#allocation5], %s243
        %v245 = vld [vmem:[%s217] sm:$0xff]
        %v246 = vld [vmem:[%s217 + $0x8] sm:$0xff]
        %v247 = vld [vmem:[%s217 + $0x10] sm:$0xff]
        %v248 = vld [vmem:[%s217 + $0x18] sm:$0xff]
        %v249 = vld [vmem:[%s217 + $0x20] sm:$0xff]
        %v250 = vld [vmem:[%s217 + $0x28] sm:$0xff]
        %v251 = vld [vmem:[%s217 + $0x30] sm:$0xff]
        %v252 = vld [vmem:[%s217 + $0x38] sm:$0xff]
        %v253 = vld [vmem:[%s217 + $0x40] sm:$0xff]
        %v254 = vld [vmem:[%s217 + $0x48] sm:$0xff]
        %v255 = vld [vmem:[%s217 + $0x50] sm:$0xff]
        %v256 = vld [vmem:[%s217 + $0x58] sm:$0xff]
        %v257 = vld [vmem:[%s217 + $0x60] sm:$0xff]
        %v258 = vld [vmem:[%s217 + $0x68] sm:$0xff]
        %v259 = vld [vmem:[%s217 + $0x70] sm:$0xff]
        %v260 = vld [vmem:[%s217 + $0x78] sm:$0xff]
        %v261 = vadd.f32 %v245, %v246
        %262 = vadd.xlane.f32.xlu0 %v261
        %v263 = vpop.xlane.xlu0 %262
        %v264 = vadd.f32 %v247, %v248
        %265 = vadd.xlane.f32.xlu0 %v264
        %v266 = vpop.xlane.xlu0 %265
        %v267 = vadd.f32 %v249, %v250
        %268 = vadd.xlane.f32.xlu0 %v267
        %v269 = vpop.xlane.xlu0 %268
        %v270 = vadd.f32 %v251, %v252
        %271 = vadd.xlane.f32.xlu0 %v270
        %v272 = vpop.xlane.xlu0 %271
        %v273 = vadd.f32 %v253, %v254
        %274 = vadd.xlane.f32.xlu0 %v273
        %v275 = vpop.xlane.xlu0 %274
        %v276 = vadd.f32 %v255, %v256
        %277 = vadd.xlane.f32.xlu0 %v276
        %v278 = vpop.xlane.xlu0 %277
        %v279 = vadd.f32 %v257, %v258
        %280 = vadd.xlane.f32.xlu0 %v279
        %v281 = vpop.xlane.xlu0 %280
        %v282 = vadd.f32 %v259, %v260
        %283 = vadd.xlane.f32.xlu0 %v282
        %v284 = vpop.xlane.xlu0 %283
        %v285 = vmul.f32 %v263, 0.00390625
        %v286 = vmul.f32 %v266, 0.00390625
        %v287 = vmul.f32 %v269, 0.00390625
        %v288 = vmul.f32 %v272, 0.00390625
        %v289 = vmul.f32 %v275, 0.00390625
        %v290 = vmul.f32 %v278, 0.00390625
        %v291 = vmul.f32 %v281, 0.00390625
        %v292 = vmul.f32 %v284, 0.00390625
        %v293 = vmax.f32 %v245, %v246
        %294 = vmax.xlane.f32.xlu0 %v293
        %v295 = vpop.xlane.xlu0 %294
        %v296 = vmax.f32 %v247, %v248
        %297 = vmax.xlane.f32.xlu0 %v296
        %v298 = vpop.xlane.xlu0 %297
        %v299 = vmax.f32 %v249, %v250
        %300 = vmax.xlane.f32.xlu0 %v299
        %v301 = vpop.xlane.xlu0 %300
        %v302 = vmax.f32 %v251, %v252
        %303 = vmax.xlane.f32.xlu0 %v302
        %v304 = vpop.xlane.xlu0 %303
        %v305 = vmax.f32 %v253, %v254
        %306 = vmax.xlane.f32.xlu0 %v305
        %v307 = vpop.xlane.xlu0 %306
        %v308 = vmax.f32 %v255, %v256
        %309 = vmax.xlane.f32.xlu0 %v308
        %v310 = vpop.xlane.xlu0 %309
        %v311 = vmax.f32 %v257, %v258
        %312 = vmax.xlane.f32.xlu0 %v311
        %v313 = vpop.xlane.xlu0 %312
        %v314 = vmax.f32 %v259, %v260
        %315 = vmax.xlane.f32.xlu0 %v314
        %v316 = vpop.xlane.xlu0 %315
        %vm317 = vcmask 7168
        %v318 = vsel %vm317, %v285, %v295
        %v319 = vsel %vm317, %v286, %v298
        %v320 = vsel %vm317, %v287, %v301
        %v321 = vsel %vm317, %v288, %v304
        %v322 = vsel %vm317, %v289, %v307
        %v323 = vsel %vm317, %v290, %v310
        %v324 = vsel %vm317, %v291, %v313
        %v325 = vsel %vm317, %v292, %v316
        %v326 = vld [vmem:[%s1] sm:$0xf]
        %v327 = vld [vmem:[%s2] sm:$0xf]
        %329 = vset.pattern.permute.xlu0 0
        %330 = vperm.xlu0 %329, %v327
        %v331 = vpop.permute.xlu0 %330
        %vm333 = vcmask 523264
        %v335 = vsel %vm333, %v326, 0
        %337 = vmatpush.msra.mxu0 0.0
        %338 = vmatpush.msra.mxu0 0.0
        %339 = vmatpush.msra.mxu0 0.0
        %340 = vmatpush.msra.mxu0 0.0
        %341 = vmatpush.msra.mxu0 0.0
        %342 = vmatpush.msra.mxu0 0.0
        %343 = vmatpush.msra.mxu0 0.0
        %344 = vmatpush.msra.mxu0 0.0
        %345 = vmatpush.msra.mxu0 %v325
        %346 = vmatpush.msra.mxu0 %v324
        %347 = vmatpush.msra.mxu0 %v323
        %348 = vmatpush.msra.mxu0 %v322
        %349 = vmatpush.msra.mxu0 %v321
        %350 = vmatpush.msra.mxu0 %v320
        %351 = vmatpush.msra.mxu0 %v319
        %352 = vmatpush.msra.mxu0 %v318
        %353 = vmatmul.f32.gmra.mxu0 %v335
        %v354 = vpop.f32.mrf.mxu0
        %v355 = vadd.f32 %v331, %v354
        %356 = vdwg.mxu0
        %v357 = vmax.f32 %v355, 0.0
        %v358 = vld [vmem:[%s3] sm:$0xff]
        %v359 = vld [vmem:[%s3 + $0x8] sm:$0xff]
        %v360 = vld [vmem:[%s3 + $0x10] sm:$0xff]
        %v361 = vld [vmem:[%s3 + $0x18] sm:$0xff]
        %v362 = vld [vmem:[%s3 + $0x20] sm:$0xff]
        %v363 = vld [vmem:[%s3 + $0x28] sm:$0xff]
        %v364 = vld [vmem:[%s3 + $0x30] sm:$0xff]
        %v365 = vld [vmem:[%s3 + $0x38] sm:$0xff]
        %v366 = vld [vmem:[%s4] sm:$0xff]
        %v367 = vld [vmem:[%s4 + $0x8] sm:$0xff]
        %v368 = vld [vmem:[%s4 + $0x10] sm:$0xff]
        %v369 = vld [vmem:[%s4 + $0x18] sm:$0xff]
        %v370 = vld [vmem:[%s4 + $0x20] sm:$0xff]
        %v371 = vld [vmem:[%s4 + $0x28] sm:$0xff]
        %v372 = vld [vmem:[%s4 + $0x30] sm:$0xff]
        %v373 = vld [vmem:[%s4 + $0x38] sm:$0xff]
        %375 = vset.pattern.permute.xlu0 0
        %376 = vperm.xlu0 %375, %v366
        %v377 = vpop.permute.xlu0 %376
        %380 = vset.pattern.permute.xlu0 0
        %381 = vperm.xlu0 %380, %v367
        %v382 = vpop.permute.xlu0 %381
        %385 = vset.pattern.permute.xlu0 0
        %386 = vperm.xlu0 %385, %v368
        %v387 = vpop.permute.xlu0 %386
        %390 = vset.pattern.permute.xlu0 0
        %391 = vperm.xlu0 %390, %v369
        %v392 = vpop.permute.xlu0 %391
        %395 = vset.pattern.permute.xlu0 0
        %396 = vperm.xlu0 %395, %v370
        %v397 = vpop.permute.xlu0 %396
        %400 = vset.pattern.permute.xlu0 0
        %401 = vperm.xlu0 %400, %v371
        %v402 = vpop.permute.xlu0 %401
        %405 = vset.pattern.permute.xlu0 0
        %406 = vperm.xlu0 %405, %v372
        %v407 = vpop.permute.xlu0 %406
        %410 = vset.pattern.permute.xlu0 0
        %411 = vperm.xlu0 %410, %v373
        %v412 = vpop.permute.xlu0 %411
        %vm414 = vcmask 31744
        %v416 = vsel %vm414, %v358, 0
        %v419 = vsel %vm414, %v359, 0
        %v422 = vsel %vm414, %v360, 0
        %v425 = vsel %vm414, %v361, 0
        %v428 = vsel %vm414, %v362, 0
        %v431 = vsel %vm414, %v363, 0
        %v434 = vsel %vm414, %v364, 0
        %v437 = vsel %vm414, %v365, 0
        %vm439 = vcmask 1043456
        %v441 = vsel %vm439, %v357, 0
        %443 = vmatpush.msra.mxu0 0.0
        %444 = vmatpush.msra.mxu0 0.0
        %445 = vmatpush.msra.mxu0 0.0
        %446 = vmatpush.msra.mxu0 0.0
        %447 = vmatpush.msra.mxu0 0.0
        %448 = vmatpush.msra.mxu0 0.0
        %449 = vmatpush.msra.mxu0 0.0
        %450 = vmatpush.msra.mxu0 0.0
        %451 = vmatpush.msra.mxu0 0.0
        %452 = vmatpush.msra.mxu0 0.0
        %453 = vmatpush.msra.mxu0 0.0
        %454 = vmatpush.msra.mxu0 0.0
        %455 = vmatpush.msra.mxu0 0.0
        %456 = vmatpush.msra.mxu0 0.0
        %457 = vmatpush.msra.mxu0 0.0
        %458 = vmatpush.msra.mxu0 %v441
        %459 = vmatmul.f32.gmra.mxu0 %v416
        %v460 = vpop.f32.mrf.mxu0
        %v461 = vadd.f32 %v377, %v460
        %462 = vmatmul.f32.gmra.mxu0 %v419
        %v463 = vpop.f32.mrf.mxu0
        %v464 = vadd.f32 %v382, %v463
        %465 = vmatmul.f32.gmra.mxu0 %v422
        %v466 = vpop.f32.mrf.mxu0
        %v467 = vadd.f32 %v387, %v466
        %468 = vmatmul.f32.gmra.mxu0 %v425
        %v469 = vpop.f32.mrf.mxu0
        %v470 = vadd.f32 %v392, %v469
        %471 = vmatmul.f32.gmra.mxu0 %v428
        %v472 = vpop.f32.mrf.mxu0
        %v473 = vadd.f32 %v397, %v472
        %474 = vmatmul.f32.gmra.mxu0 %v431
        %v475 = vpop.f32.mrf.mxu0
        %v476 = vadd.f32 %v402, %v475
        %477 = vmatmul.f32.gmra.mxu0 %v434
        %v478 = vpop.f32.mrf.mxu0
        %v479 = vadd.f32 %v407, %v478
        %480 = vmatmul.f32.gmra.mxu0 %v437
        %v481 = vpop.f32.mrf.mxu0
        %v482 = vadd.f32 %v412, %v481
        %483 = vdwg.mxu0
        %492 = vrot.lane.b32.xlu0 %v461, 127
        %v493 = vpop.permute.xlu0 %492
        %494 = vrot.lane.b32.xlu0 %v464, 127
        %v495 = vpop.permute.xlu0 %494
        %496 = vrot.lane.b32.xlu0 %v467, 127
        %v497 = vpop.permute.xlu0 %496
        %498 = vrot.lane.b32.xlu0 %v470, 127
        %v499 = vpop.permute.xlu0 %498
        %500 = vrot.lane.b32.xlu0 %v473, 127
        %v501 = vpop.permute.xlu0 %500
        %502 = vrot.lane.b32.xlu0 %v476, 127
        %v503 = vpop.permute.xlu0 %502
        %504 = vrot.lane.b32.xlu0 %v479, 127
        %v505 = vpop.permute.xlu0 %504
        %506 = vrot.lane.b32.xlu0 %v482, 127
        %v507 = vpop.permute.xlu0 %506
        %v516 = vadd.f32 %v461, %v493
        %v517 = vadd.f32 %v464, %v495
        %v518 = vadd.f32 %v467, %v497
        %v519 = vadd.f32 %v470, %v499
        %v520 = vadd.f32 %v473, %v501
        %v521 = vadd.f32 %v476, %v503
        %v522 = vadd.f32 %v479, %v505
        %v523 = vadd.f32 %v482, %v507
        %v524 = vxor.u32 %v516, 2147483648
        %v525 = vxor.u32 %v517, 2147483648
        %v526 = vxor.u32 %v518, 2147483648
        %v527 = vxor.u32 %v519, 2147483648
        %v528 = vxor.u32 %v520, 2147483648
        %v529 = vxor.u32 %v521, 2147483648
        %v530 = vxor.u32 %v522, 2147483648
        %v531 = vxor.u32 %v523, 2147483648
        %v532 = vmul.f32 %v524, 1.442695
        %v533 = vpow.pop %v532
        %v534 = vmul.f32 %v525, 1.442695
        %v535 = vpow.pop %v534
        %v536 = vmul.f32 %v526, 1.442695
        %v537 = vpow.pop %v536
        %v538 = vmul.f32 %v527, 1.442695
        %v539 = vpow.pop %v538
        %v540 = vmul.f32 %v528, 1.442695
        %v541 = vpow.pop %v540
        %v542 = vmul.f32 %v529, 1.442695
        %v543 = vpow.pop %v542
        %v544 = vmul.f32 %v530, 1.442695
        %v545 = vpow.pop %v544
        %v546 = vmul.f32 %v531, 1.442695
        %v547 = vpow.pop %v546
        %v548 = vadd.f32 %v533, 1.0
        %v549 = vadd.f32 %v535, 1.0
        %v550 = vadd.f32 %v537, 1.0
        %v551 = vadd.f32 %v539, 1.0
        %v552 = vadd.f32 %v541, 1.0
        %v553 = vadd.f32 %v543, 1.0
        %v554 = vadd.f32 %v545, 1.0
        %v555 = vadd.f32 %v547, 1.0
        %v556 = vrcp.pop %v548
        %v557 = vmul.f32 %v548, %v556
        %v558 = vsub.f32 1.0, %v557
        %v559 = vmul.f32 %v556, %v558
        %v560 = vadd.f32 %v556, %v559
        %vm561 = vweird.f32 %v548
        %vm562 = vweird.f32 %v556
        %vm563 = vmor %vm561, %vm562
        %v564 = vsel %vm563, %v556, %v560
        %v565 = vand.u32 2147483647, %v548
        %vm566 = vcmp.eq.f32.partialorder %v565, 8.507059e+37
        %v567 = vand.u32 %v548, 2147483648
        %v568 = vor.u32 1.1754944e-38, %v567
        %v569 = vsel %vm566, %v568, %v564
        %v570 = vmul.f32 1.0, %v569
        %v571 = vrcp.pop %v549
        %v572 = vmul.f32 %v549, %v571
        %v573 = vsub.f32 1.0, %v572
        %v574 = vmul.f32 %v571, %v573
        %v575 = vadd.f32 %v571, %v574
        %vm576 = vweird.f32 %v549
        %vm577 = vweird.f32 %v571
        %vm578 = vmor %vm576, %vm577
        %v579 = vsel %vm578, %v571, %v575
        %v580 = vand.u32 2147483647, %v549
        %vm581 = vcmp.eq.f32.partialorder %v580, 8.507059e+37
        %v582 = vand.u32 %v549, 2147483648
        %v583 = vor.u32 1.1754944e-38, %v582
        %v584 = vsel %vm581, %v583, %v579
        %v585 = vmul.f32 1.0, %v584
        %v586 = vrcp.pop %v550
        %v587 = vmul.f32 %v550, %v586
        %v588 = vsub.f32 1.0, %v587
        %v589 = vmul.f32 %v586, %v588
        %v590 = vadd.f32 %v586, %v589
        %vm591 = vweird.f32 %v550
        %vm592 = vweird.f32 %v586
        %vm593 = vmor %vm591, %vm592
        %v594 = vsel %vm593, %v586, %v590
        %v595 = vand.u32 2147483647, %v550
        %vm596 = vcmp.eq.f32.partialorder %v595, 8.507059e+37
        %v597 = vand.u32 %v550, 2147483648
        %v598 = vor.u32 1.1754944e-38, %v597
        %v599 = vsel %vm596, %v598, %v594
        %v600 = vmul.f32 1.0, %v599
        %v601 = vrcp.pop %v551
        %v602 = vmul.f32 %v551, %v601
        %v603 = vsub.f32 1.0, %v602
        %v604 = vmul.f32 %v601, %v603
        %v605 = vadd.f32 %v601, %v604
        %vm606 = vweird.f32 %v551
        %vm607 = vweird.f32 %v601
        %vm608 = vmor %vm606, %vm607
        %v609 = vsel %vm608, %v601, %v605
        %v610 = vand.u32 2147483647, %v551
        %vm611 = vcmp.eq.f32.partialorder %v610, 8.507059e+37
        %v612 = vand.u32 %v551, 2147483648
        %v613 = vor.u32 1.1754944e-38, %v612
        %v614 = vsel %vm611, %v613, %v609
        %v615 = vmul.f32 1.0, %v614
        %v616 = vrcp.pop %v552
        %v617 = vmul.f32 %v552, %v616
        %v618 = vsub.f32 1.0, %v617
        %v619 = vmul.f32 %v616, %v618
        %v620 = vadd.f32 %v616, %v619
        %vm621 = vweird.f32 %v552
        %vm622 = vweird.f32 %v616
        %vm623 = vmor %vm621, %vm622
        %v624 = vsel %vm623, %v616, %v620
        %v625 = vand.u32 2147483647, %v552
        %vm626 = vcmp.eq.f32.partialorder %v625, 8.507059e+37
        %v627 = vand.u32 %v552, 2147483648
        %v628 = vor.u32 1.1754944e-38, %v627
        %v629 = vsel %vm626, %v628, %v624
        %v630 = vmul.f32 1.0, %v629
        %v631 = vrcp.pop %v553
        %v632 = vmul.f32 %v553, %v631
        %v633 = vsub.f32 1.0, %v632
        %v634 = vmul.f32 %v631, %v633
        %v635 = vadd.f32 %v631, %v634
        %vm636 = vweird.f32 %v553
        %vm637 = vweird.f32 %v631
        %vm638 = vmor %vm636, %vm637
        %v639 = vsel %vm638, %v631, %v635
        %v640 = vand.u32 2147483647, %v553
        %vm641 = vcmp.eq.f32.partialorder %v640, 8.507059e+37
        %v642 = vand.u32 %v553, 2147483648
        %v643 = vor.u32 1.1754944e-38, %v642
        %v644 = vsel %vm641, %v643, %v639
        %v645 = vmul.f32 1.0, %v644
        %v646 = vrcp.pop %v554
        %v647 = vmul.f32 %v554, %v646
        %v648 = vsub.f32 1.0, %v647
        %v649 = vmul.f32 %v646, %v648
        %v650 = vadd.f32 %v646, %v649
        %vm651 = vweird.f32 %v554
        %vm652 = vweird.f32 %v646
        %vm653 = vmor %vm651, %vm652
        %v654 = vsel %vm653, %v646, %v650
        %v655 = vand.u32 2147483647, %v554
        %vm656 = vcmp.eq.f32.partialorder %v655, 8.507059e+37
        %v657 = vand.u32 %v554, 2147483648
        %v658 = vor.u32 1.1754944e-38, %v657
        %v659 = vsel %vm656, %v658, %v654
        %v660 = vmul.f32 1.0, %v659
        %v661 = vrcp.pop %v555
        %v662 = vmul.f32 %v555, %v661
        %v663 = vsub.f32 1.0, %v662
        %v664 = vmul.f32 %v661, %v663
        %v665 = vadd.f32 %v661, %v664
        %vm666 = vweird.f32 %v555
        %vm667 = vweird.f32 %v661
        %vm668 = vmor %vm666, %vm667
        %v669 = vsel %vm668, %v661, %v665
        %v670 = vand.u32 2147483647, %v555
        %vm671 = vcmp.eq.f32.partialorder %v670, 8.507059e+37
        %v672 = vand.u32 %v555, 2147483648
        %v673 = vor.u32 1.1754944e-38, %v672
        %v674 = vsel %vm671, %v673, %v669
        %v675 = vmul.f32 1.0, %v674
        %677 = vset.pattern.permute.xlu0 0
        %678 = vperm.xlu0 %677, %v570
        %v679 = vpop.permute.xlu0 %678
        %682 = vset.pattern.permute.xlu0 0
        %683 = vperm.xlu0 %682, %v585
        %v684 = vpop.permute.xlu0 %683
        %687 = vset.pattern.permute.xlu0 0
        %688 = vperm.xlu0 %687, %v600
        %v689 = vpop.permute.xlu0 %688
        %692 = vset.pattern.permute.xlu0 0
        %693 = vperm.xlu0 %692, %v615
        %v694 = vpop.permute.xlu0 %693
        %697 = vset.pattern.permute.xlu0 0
        %698 = vperm.xlu0 %697, %v630
        %v699 = vpop.permute.xlu0 %698
        %702 = vset.pattern.permute.xlu0 0
        %703 = vperm.xlu0 %702, %v645
        %v704 = vpop.permute.xlu0 %703
        %707 = vset.pattern.permute.xlu0 0
        %708 = vperm.xlu0 %707, %v660
        %v709 = vpop.permute.xlu0 %708
        %712 = vset.pattern.permute.xlu0 0
        %713 = vperm.xlu0 %712, %v675
        %v714 = vpop.permute.xlu0 %713
        %v716 = vmul.f32 %v245, %v679
        %v717 = vmul.f32 %v246, %v679
        %v718 = vmul.f32 %v247, %v684
        %v719 = vmul.f32 %v248, %v684
        %v720 = vmul.f32 %v249, %v689
        %v721 = vmul.f32 %v250, %v689
        %v722 = vmul.f32 %v251, %v694
        %v723 = vmul.f32 %v252, %v694
        %v724 = vmul.f32 %v253, %v699
        %v725 = vmul.f32 %v254, %v699
        %v726 = vmul.f32 %v255, %v704
        %v727 = vmul.f32 %v256, %v704
        %v728 = vmul.f32 %v257, %v709
        %v729 = vmul.f32 %v258, %v709
        %v730 = vmul.f32 %v259, %v714
        %v731 = vmul.f32 %v260, %v714
        %732 = vst [vmem:[%s244] sm:$0xff] %v716
        %733 = vst [vmem:[%s244 + $0x8] sm:$0xff] %v717
        %734 = vst [vmem:[%s244 + $0x10] sm:$0xff] %v718
        %735 = vst [vmem:[%s244 + $0x18] sm:$0xff] %v719
        %736 = vst [vmem:[%s244 + $0x20] sm:$0xff] %v720
        %737 = vst [vmem:[%s244 + $0x28] sm:$0xff] %v721
        %738 = vst [vmem:[%s244 + $0x30] sm:$0xff] %v722
        %739 = vst [vmem:[%s244 + $0x38] sm:$0xff] %v723
        %740 = vst [vmem:[%s244 + $0x40] sm:$0xff] %v724
        %741 = vst [vmem:[%s244 + $0x48] sm:$0xff] %v725
        %742 = vst [vmem:[%s244 + $0x50] sm:$0xff] %v726
        %743 = vst [vmem:[%s244 + $0x58] sm:$0xff] %v727
        %744 = vst [vmem:[%s244 + $0x60] sm:$0xff] %v728
        %745 = vst [vmem:[%s244 + $0x68] sm:$0xff] %v729
        %746 = vst [vmem:[%s244 + $0x70] sm:$0xff] %v730
        %747 = vst [vmem:[%s244 + $0x78] sm:$0xff] %v731
        %s748 = sand.u32 %s140, 1
        %s749 = scalar_lea.sflag [#allocation4], %s748
        %s750 = sand.u32 %s140, 1
        %s751 = smul.addr %s750, 128
        %s752 = scalar_lea.vmem [#allocation5], %s751
        // Predicated region
        $region45: #{tpu_custom_call.1} parent=39 // pred_check
          %p753 = pneg %p150
        $region46: #{tpu_custom_call.1} parent=39 // pred_check_branch
          %755 = sbr.rel (%p753) target = $region48
        $region47: #{tpu_custom_call.1} parent=39 // pred_region
          %757 = vsyncadd %s749, 0
          %s758 = smul.addr %s22, 16
          %s759 = smul.addr %s758, 8
          %s760 = scalar_lea.hbm %s5, %s759
          %s761 = sshll.u32 %s752, 4
          %s762 = int_to_ptr.vmem [resolvable:$true] %s761
          %s763 = sshll.u32 %s760, 4
          %s764 = int_to_ptr.hbm [resolvable:$true] %s763
          %769 = dma.vmem_to_hbm [thread:$0]  %s762, 2048, %s764, %s749, 256, 256, 16
        $region48: #{tpu_custom_call.1} parent=39 // pred_fallthru
          _
      $region40: #{tpu_custom_call.1} parent=5 // pred_fallthru
        _
      %p770 = scmp.le.s32.totalorder 2, %s17
      // Predicated region
      $region49: #{tpu_custom_call.1} parent=5 // pred_check
        %p771 = pneg %p770
      $region50: #{tpu_custom_call.1} parent=5 // pred_check_branch
        %773 = sbr.rel (%p771) target = $region52
      $region51: #{tpu_custom_call.1} parent=5 // pred_region
        %s774 = ssub.s32 %s17, 2
        // Predicated region
        $region53: #{tpu_custom_call.1} parent=51 // pred_check
          %p775 = pneg %p156
        $region54: #{tpu_custom_call.1} parent=51 // pred_check_branch
          %777 = sbr.rel (%p775) target = $region56
        $region55: #{tpu_custom_call.1} parent=51 // pred_region
          %s778 = sand.u32 %s141, 1
          %s779 = scalar_lea.sflag [#allocation4], %s778
          %s780 = sand.u32 %s141, 1
          %s781 = smul.addr %s780, 128
          %s782 = scalar_lea.vmem [#allocation5], %s781
          %784 = dma.done %s779, 2048
        $region56: #{tpu_custom_call.1} parent=51 // pred_fallthru
          _
      $region52: #{tpu_custom_call.1} parent=5 // pred_fallthru
        _
    $region6: #{tpu_custom_call.1} parent=1 // loop_footer
      %s21 = sadd.s32 1, %s17
    $region7: #{tpu_custom_call.1} parent=1 // loop_footer_branch
      %16 = sbr.rel target = $region3
    $region8: #{tpu_custom_call.1} parent=1 // loop_exit
      _
    %785 = vsyncpa [#allocation3], 1
    %s786 = scalar_lea.sflag [#allocation3], 1
    %787 = vsyncpa %s786, 1
    %788 = vsyncpa [#allocation4], 1
    %s789 = scalar_lea.sflag [#allocation4], 1
    %790 = vsyncpa %s789, 1

</llo_original>
